<compile_context>
chip_gen: v6e
topology: v6e:2x2x1
jax: 0.10.0
libtpu: 0.0.40
codegen_flags: <defaults>
</compile_context>

<pallas_src>
import jax
import jax.numpy as jnp
from jax.experimental import pallas as pl
from jax.experimental.pallas import tpu as pltpu

IN_FEATURES = 8
OUT_FEATURES = 6
ROWS_PER_PACK = 16                       # 16 rows * 8 feats = 128 lanes (dense)
PACKED_IN = ROWS_PER_PACK * IN_FEATURES   # 128
PACKED_OUT = ROWS_PER_PACK * OUT_FEATURES  # 96
DEFAULT_TILE_ROWS = 2048  # packed rows / grid step (= 32768 batch rows, ~3.5 MiB VMEM)


def linear_hardswish_kernel(xp_ref, wb_ref, bp_ref, o_ref):
    # xp_ref: (TR, 128) packed rows;  wb_ref: (128, 96) block-diag W^T;
    # bp_ref: (1, 96) tiled bias;     o_ref: (TR, 96) packed output.
    acc = jnp.dot(xp_ref[...], wb_ref[...],
                  preferred_element_type=jnp.float32) + bp_ref[...]
    # hardswish gate: clamp(clamp(l1+3,0,6),0,6) collapses to one clamp;
    # /6 replaced by *(1/6) fused into the gate.
    gate = jnp.clip(acc + 3.0, 0.0, 6.0) * (1.0 / 6.0)
    o_ref[...] = (acc * gate).astype(o_ref.dtype)


def _round_up(n, m):
    return ((n + m - 1) // m) * m


def _block_diag_weight(weight):
    """(6, 8) PyTorch weight -> (128, 96) block-diag with 16 copies of W^T."""
    wt = weight.T.astype(jnp.float32)                       # (8, 6)
    eye = jnp.eye(ROWS_PER_PACK, dtype=jnp.float32)          # (16, 16)
    # w_block[r*8 + k, s*6 + o] = eye[r, s] * wt[k, o]
    wb = jnp.einsum("rs,ko->rkso", eye, wt)
    return wb.reshape(PACKED_IN, PACKED_OUT)


def linear_hardswish(x, weight, bias, *, tile_rows=DEFAULT_TILE_ROWS):
    """x: (B, 8) f32, weight: (6, 8) f32 (PyTorch convention), bias: (6,) f32."""
    batch = x.shape[0]
    padded_batch = _round_up(batch, ROWS_PER_PACK)
    if padded_batch != batch:
        # At most 15 zero rows; no copy at all when B % 16 == 0.
        x = jnp.pad(x, ((0, padded_batch - batch), (0, 0)))
    n_packed = padded_batch // ROWS_PER_PACK

    xp = x.reshape(n_packed, PACKED_IN)                      # row-major repack
    wb = _block_diag_weight(weight)                          # (128, 96)
    bp = jnp.tile(bias.reshape(1, OUT_FEATURES).astype(jnp.float32),
                  (1, ROWS_PER_PACK))                        # (1, 96)

    # Single full-extent tile for small inputs, fixed (8-aligned) tile otherwise.
    tr = min(tile_rows, n_packed)
    if n_packed > tile_rows:
        tr = tile_rows
    grid = (pl.cdiv(n_packed, tr),)

    cost = pl.CostEstimate(
        flops=2 * padded_batch * IN_FEATURES * OUT_FEATURES
              + 5 * padded_batch * OUT_FEATURES,
        transcendentals=0,
        bytes_accessed=4 * (padded_batch * IN_FEATURES
                            + padded_batch * OUT_FEATURES
                            + PACKED_IN * PACKED_OUT + PACKED_OUT),
    )

    out_packed = pl.pallas_call(
        linear_hardswish_kernel,
        out_shape=jax.ShapeDtypeStruct((n_packed, PACKED_OUT), jnp.float32),
        grid=grid,
        in_specs=[
            pl.BlockSpec((tr, PACKED_IN), lambda i: (i, 0)),
            pl.BlockSpec((PACKED_IN, PACKED_OUT), lambda i: (0, 0)),
            pl.BlockSpec((1, PACKED_OUT), lambda i: (0, 0)),
        ],
        out_specs=pl.BlockSpec((tr, PACKED_OUT), lambda i: (i, 0)),
        compiler_params=pltpu.CompilerParams(
            dimension_semantics=("parallel",),
        ),
        cost_estimate=cost,
    )(xp, wb, bp)

    out = out_packed.reshape(padded_batch, OUT_FEATURES)
    if padded_batch != batch:
        out = out[:batch]
    return out


def _reference(x, weight, bias):
    l1 = x @ weight.T + bias
    return l1 * jnp.clip(jnp.clip(l1 + 3.0, 0.0, 6.0), 0.0, 6.0) / 6.0


if __name__ == "__main__":
    key = jax.random.PRNGKey(0)
    kx, kw, kb, kx2 = jax.random.split(key, 4)

    # Deterministic "Linear(8, 6)" parameters (PyTorch-like uniform init range).
    bound = 1.0 / (IN_FEATURES ** 0.5)
    weight = jax.random.uniform(kw, (OUT_FEATURES, IN_FEATURES),
                                minval=-bound, maxval=bound, dtype=jnp.float32)
    bias = jax.random.uniform(kb, (OUT_FEATURES,),
                              minval=-bound, maxval=bound, dtype=jnp.float32)

    # Small primary test (batch=2 -> padded to one packed row, single grid step).
    x = jax.random.normal(kx, (2, IN_FEATURES), dtype=jnp.float32)
    out = linear_hardswish(x, weight, bias)
    jax.block_until_ready(out)
    assert out.shape == (2, OUT_FEATURES)
    assert jnp.allclose(out, _reference(x, weight, bias), atol=1e-5, rtol=1e-5), \
        "mismatch vs reference (batch=2)"

    # Secondary test: multiple grid steps, partial edge tile, non-multiple-of-16 batch.
    x2 = jax.random.normal(kx2, (300, IN_FEATURES), dtype=jnp.float32)
    out2 = linear_hardswish(x2, weight, bias, tile_rows=8)
    jax.block_until_ready(out2)
    assert out2.shape == (300, OUT_FEATURES)
    assert jnp.allclose(out2, _reference(x2, weight, bias), atol=1e-5, rtol=1e-5), \
        "mismatch vs reference (batch=300, tiled)"

    print("KERNEL_OK")
</pallas_src>

<mosaic_0001>
module attributes {stable_mosaic.version = 11 : i64} {
  func.func @linear_hardswish_kernel(%arg0: i32, %arg1: memref<1x128xf32, #tpu.memory_space<vmem>>, %arg2: memref<128x96xf32, #tpu.memory_space<vmem>>, %arg3: memref<1x96xf32, #tpu.memory_space<vmem>>, %arg4: memref<1x96xf32, #tpu.memory_space<vmem>>) attributes {dimension_semantics = [#tpu.dimension_semantics<parallel>], iteration_bounds = array<i64: 1>, scalar_prefetch = 0 : i64, scratch_operands = 0 : i64, tpu.core_type = #tpu.core_type<tc>, window_params = [{transform_indices = @transform_0, window_bounds = array<i64: 1, 128>}, {pipeline_mode = #tpu.pipeline_mode<synchronous>, transform_indices = @transform_1, window_bounds = array<i64: 128, 96>}, {pipeline_mode = #tpu.pipeline_mode<synchronous>, transform_indices = @transform_2, window_bounds = array<i64: 1, 96>}, {transform_indices = @transform_3, window_bounds = array<i64: 1, 96>}]} {
    %c0 = arith.constant 0 : index
    %c0_0 = arith.constant 0 : index
    %0 = vector.load %arg1[%c0, %c0_0] : memref<1x128xf32, #tpu.memory_space<vmem>>, vector<1x128xf32>
    %c0_1 = arith.constant 0 : index
    %c0_2 = arith.constant 0 : index
    %1 = vector.load %arg2[%c0_1, %c0_2] : memref<128x96xf32, #tpu.memory_space<vmem>>, vector<128x96xf32>
    %cst = arith.constant dense<0.000000e+00> : vector<1x96xf32>
    %2 = tpu.matmul %0, %1, %cst {dimension_numbers = #tpu.dot_dimension_numbers<[1], [0], [0], [1], [0, 0, 1, 1], [], []>} : vector<1x128xf32>, vector<128x96xf32>, vector<1x96xf32> -> vector<1x96xf32>
    %c0_3 = arith.constant 0 : index
    %c0_4 = arith.constant 0 : index
    %3 = vector.load %arg3[%c0_3, %c0_4] : memref<1x96xf32, #tpu.memory_space<vmem>>, vector<1x96xf32>
    %4 = arith.addf %2, %3 : vector<1x96xf32>
    %cst_5 = arith.constant 3.000000e+00 : f32
    %5 = vector.broadcast %cst_5 : f32 to vector<1x96xf32>
    %6 = arith.addf %4, %5 : vector<1x96xf32>
    %cst_6 = arith.constant 0.000000e+00 : f32
    %cst_7 = arith.constant 6.000000e+00 : f32
    %7 = vector.broadcast %cst_6 : f32 to vector<1x96xf32>
    %8 = arith.maximumf %7, %6 : vector<1x96xf32>
    %9 = vector.broadcast %cst_7 : f32 to vector<1x96xf32>
    %10 = arith.minimumf %9, %8 : vector<1x96xf32>
    %cst_8 = arith.constant 0.166666672 : f32
    %11 = vector.broadcast %cst_8 : f32 to vector<1x96xf32>
    %12 = arith.mulf %10, %11 : vector<1x96xf32>
    %13 = arith.mulf %4, %12 : vector<1x96xf32>
    %c0_9 = arith.constant 0 : index
    %c0_10 = arith.constant 0 : index
    %14 = vector.load %arg4[%c0_9, %c0_10] : memref<1x96xf32, #tpu.memory_space<vmem>>, vector<1x96xf32>
    tpu.vector_store %arg4[%c0_9, %c0_10], %13 {strides = array<i32>} : memref<1x96xf32, #tpu.memory_space<vmem>>, vector<1x96xf32>,
    return
  }
  func.func @transform_0(%arg0: i32) -> (i32, i32) {
    %c0_i32 = arith.constant 0 : i32
    %c0_i32_0 = arith.constant 0 : i32
    return %arg0, %c0_i32 : i32, i32
  }
  func.func @transform_1(%arg0: i32) -> (i32, i32) {
    %c0_i32 = arith.constant 0 : i32
    %c0_i32_0 = arith.constant 0 : i32
    %c0_i32_1 = arith.constant 0 : i32
    return %c0_i32, %c0_i32_0 : i32, i32
  }
  func.func @transform_2(%arg0: i32) -> (i32, i32) {
    %c0_i32 = arith.constant 0 : i32
    %c0_i32_0 = arith.constant 0 : i32
    %c0_i32_1 = arith.constant 0 : i32
    return %c0_i32, %c0_i32_0 : i32, i32
  }
  func.func @transform_3(%arg0: i32) -> (i32, i32) {
    %c0_i32 = arith.constant 0 : i32
    %c0_i32_0 = arith.constant 0 : i32
    return %arg0, %c0_i32 : i32, i32
  }
}

</mosaic_0001>

<llo_original>
// kernel: tpu_custom_call.1
$region0: #{tpu_custom_call.1}
  #allocation0 [shape = 'u32[]', space=smem, size = 0x4, offset = 0x4, fixed_abs, tag = 'smem constant byte address 0x4 - core index']
  #allocation1 [shape = 'u32[144,128]{1,0:T(1,128)}', space=vmem, size = 0x12000, scoped, tag = 'internal scratch']
  %s0 = inlined_call_operand.vmem [shape: f32[1,128], index: 0, kind: input, shape index: {}]
  %s1 = inlined_call_operand.vmem [shape: f32[128,96], index: 1, kind: input, shape index: {}]
  %s2 = inlined_call_operand.vmem [shape: f32[1,96], index: 2, kind: input, shape index: {}]
  %s3 = inlined_call_operand.hbm [shape: f32[1,96], index: 3, kind: output, shape index: {}]
  %s4 = sld [smem:[#allocation0]]
  $region22: #{tpu_custom_call.1} parent=0
    _
  %s6 = ssub.s32 1, %s4
  %s7 = scalar_select 0, %s6, %s4
  $region1: #{tpu_custom_call.1} parent=0
    #allocation2 [shape = 'u8[512]{0}', space=vmem, size = 0x400, scoped, tag = 'output window, operand 0, single buffered']
    #allocation3 [shape = 's32[1]{0}', space=sflag, size = 0x4, scoped, tag = 'scoped memory for tpu_custom_call.1']
    %8 = vsyncpa [#allocation3], 0
    // Predicated region
    $region2: #{tpu_custom_call.1} parent=1 // pred_check
      _
    $region3: #{tpu_custom_call.1} parent=1 // pred_check_branch
      %10 = sbr.rel (0) target = $region5
    $region4: #{tpu_custom_call.1} parent=1 // pred_region
      _
    $region5: #{tpu_custom_call.1} parent=1 // pred_fallthru
      _
    // Predicated region
    $region6: #{tpu_custom_call.1} parent=1 // pred_check
      _
    $region7: #{tpu_custom_call.1} parent=1 // pred_check_branch
      %12 = sbr.rel (0) target = $region9
    $region8: #{tpu_custom_call.1} parent=1 // pred_region
      _
    $region9: #{tpu_custom_call.1} parent=1 // pred_fallthru
      _
    // Predicated region
    $region10: #{tpu_custom_call.1} parent=1 // pred_check
      _
    $region11: #{tpu_custom_call.1} parent=1 // pred_check_branch
      %14 = sbr.rel (0) target = $region13
    $region12: #{tpu_custom_call.1} parent=1 // pred_region
      _
    $region13: #{tpu_custom_call.1} parent=1 // pred_fallthru
      _
    %v15 = vld [vmem:[%s0] sm:$0x1]
    %v16 = vld [vmem:[%s1] sm:$0xff]
    %v17 = vld [vmem:[%s1 + $0x8] sm:$0xff]
    %v18 = vld [vmem:[%s1 + $0x10] sm:$0xff]
    %v19 = vld [vmem:[%s1 + $0x18] sm:$0xff]
    %v20 = vld [vmem:[%s1 + $0x20] sm:$0xff]
    %v21 = vld [vmem:[%s1 + $0x28] sm:$0xff]
    %v22 = vld [vmem:[%s1 + $0x30] sm:$0xff]
    %v23 = vld [vmem:[%s1 + $0x38] sm:$0xff]
    %v24 = vld [vmem:[%s1 + $0x40] sm:$0xff]
    %v25 = vld [vmem:[%s1 + $0x48] sm:$0xff]
    %v26 = vld [vmem:[%s1 + $0x50] sm:$0xff]
    %v27 = vld [vmem:[%s1 + $0x58] sm:$0xff]
    %v28 = vld [vmem:[%s1 + $0x60] sm:$0xff]
    %v29 = vld [vmem:[%s1 + $0x68] sm:$0xff]
    %v30 = vld [vmem:[%s1 + $0x70] sm:$0xff]
    %v31 = vld [vmem:[%s1 + $0x78] sm:$0xff]
    %v32 = vld [vmem:[%s2] sm:$0x1]
    %33 = vmatprep.subr.mxu0 0.0
    %34 = vmatpush1.msra.mxu0 %v31
    %35 = vmatprep.subr.mxu0 0.0
    %36 = vmatpush1.msra.mxu0 %v30
    %37 = vmatprep.subr.mxu0 0.0
    %38 = vmatpush1.msra.mxu0 %v29
    %39 = vmatprep.subr.mxu0 0.0
    %40 = vmatpush1.msra.mxu0 %v28
    %41 = vmatprep.subr.mxu0 0.0
    %42 = vmatpush1.msra.mxu0 %v27
    %43 = vmatprep.subr.mxu0 0.0
    %44 = vmatpush1.msra.mxu0 %v26
    %45 = vmatprep.subr.mxu0 0.0
    %46 = vmatpush1.msra.mxu0 %v25
    %47 = vmatprep.subr.mxu0 0.0
    %48 = vmatpush1.msra.mxu0 %v24
    %49 = vmatprep.subr.mxu0 0.0
    %50 = vmatpush1.msra.mxu0 %v23
    %51 = vmatprep.subr.mxu0 0.0
    %52 = vmatpush1.msra.mxu0 %v22
    %53 = vmatprep.subr.mxu0 0.0
    %54 = vmatpush1.msra.mxu0 %v21
    %55 = vmatprep.subr.mxu0 0.0
    %56 = vmatpush1.msra.mxu0 %v20
    %57 = vmatprep.subr.mxu0 0.0
    %58 = vmatpush1.msra.mxu0 %v19
    %59 = vmatprep.subr.mxu0 0.0
    %60 = vmatpush1.msra.mxu0 %v18
    %61 = vmatprep.subr.mxu0 0.0
    %62 = vmatpush1.msra.mxu0 %v17
    %63 = vmatprep.subr.mxu0 0.0
    %64 = vmatpush1.msra.mxu0 %v16
    %65 = vmatprep.subr.mxu0 0.0
    %66 = vmatpush2.msra.mxu0 0.0
    %67 = vmatprep.subr.mxu0 0.0
    %68 = vmatpush2.msra.mxu0 0.0
    %69 = vmatprep.subr.mxu0 0.0
    %70 = vmatpush2.msra.mxu0 0.0
    %71 = vmatprep.subr.mxu0 0.0
    %72 = vmatpush2.msra.mxu0 0.0
    %73 = vmatprep.subr.mxu0 0.0
    %74 = vmatpush2.msra.mxu0 0.0
    %75 = vmatprep.subr.mxu0 0.0
    %76 = vmatpush2.msra.mxu0 0.0
    %77 = vmatprep.subr.mxu0 0.0
    %78 = vmatpush2.msra.mxu0 0.0
    %79 = vmatprep.subr.mxu0 0.0
    %80 = vmatpush2.msra.mxu0 0.0
    %81 = vmatprep.subr.mxu0 0.0
    %82 = vmatpush2.msra.mxu0 0.0
    %83 = vmatprep.subr.mxu0 0.0
    %84 = vmatpush2.msra.mxu0 0.0
    %85 = vmatprep.subr.mxu0 0.0
    %86 = vmatpush2.msra.mxu0 0.0
    %87 = vmatprep.subr.mxu0 0.0
    %88 = vmatpush2.msra.mxu0 0.0
    %89 = vmatprep.subr.mxu0 0.0
    %90 = vmatpush2.msra.mxu0 0.0
    %91 = vmatprep.subr.mxu0 0.0
    %92 = vmatpush2.msra.mxu0 0.0
    %93 = vmatprep.subr.mxu0 0.0
    %94 = vmatpush2.msra.mxu0 0.0
    %95 = vmatprep.subr.mxu0 0.0
    %96 = vmatpush2.msra.mxu0 0.0
    %97 = vmatprep.mubr.f32.mxu0 0.0
    %98 = vmatmul.mubr.f32.gmra.mxu0 %v15
    %v99 = vpop.f32.mrf.mxu0
    %v100 = vadd.f32 %v32, %v99
    %v101 = vpop.f32.mrf.mxu0
    %102 = vdwg.mxu0
    %v103 = vadd.f32 %v100, 3.0
    %v104 = vmax.f32 %v103, 0.0
    %v105 = vmin.f32 %v104, 6.0
    %v106 = vmul.f32 %v105, 0.16666667
    %v107 = vmul.f32 %v100, %v106
    %vm108 = vcmask 778240
    %109 = vst.msk [vmem:[#allocation2] sm:$0x1] %vm108, %v107
    // Predicated region
    $region14: #{tpu_custom_call.1} parent=1 // pred_check
      _
    $region15: #{tpu_custom_call.1} parent=1 // pred_check_branch
      %111 = sbr.rel (0) target = $region17
    $region16: #{tpu_custom_call.1} parent=1 // pred_region
      %s113 = ssub.s32 16, 16
      %114 = vsyncadd [#allocation3], %s113
      %s116 = sshll.u32 [#allocation2], 4
      %s117 = int_to_ptr.vmem [resolvable:$true] %s116
      %119 = dma.vmem_to_hbm [thread:$0]  %s117, 16, %s3, [#allocation3]
    $region17: #{tpu_custom_call.1} parent=1 // pred_fallthru
      _
    // Predicated region
    $region18: #{tpu_custom_call.1} parent=1 // pred_check
      _
    $region19: #{tpu_custom_call.1} parent=1 // pred_check_branch
      %121 = sbr.rel (0) target = $region21
    $region20: #{tpu_custom_call.1} parent=1 // pred_region
      %122 = dma.done [#allocation3], 16
    $region21: #{tpu_custom_call.1} parent=1 // pred_fallthru
      _
    %123 = vsyncpa [#allocation3], 1

</llo_original>
